<compile_context>
chip_gen: v6e
topology: v6e:2x2x1
jax: 0.10.0
libtpu: 0.0.40
codegen_flags: <defaults>
</compile_context>

<pallas_src>
import functools

import jax
import jax.numpy as jnp
from jax import lax
from jax.experimental import pallas as pl
from jax.experimental.pallas import tpu as pltpu


def _cdiv(a, b):
    return (a + b - 1) // b


def _round_up(x, m):
    return _cdiv(x, m) * m


_INV_SQRT2 = 0.7071067811865476


def _gelu(x, approximate):
    if approximate:
        # tanh formulation: transcendental goes to the EUP slot (feedback #3).
        return jax.nn.gelu(x, approximate=True)
    # exact erf formulation == PyTorch nn.GELU() default.
    return 0.5 * x * (1.0 + lax.erf(x * _INV_SQRT2))


def mlp_kernel(x_ref, w1_ref, b1_ref, g_ref, beta_ref,
               w2_ref, b2_ref, w3_ref, b3_ref, o_ref, *, chunk, gelu_approx):
    """x_ref: (block_b, in_dim) natural layout.  o_ref: (out_dim, block_b)."""
    nchunks = o_ref.shape[-1] // chunk          # static

    def body(c, carry):
        j = pl.multiple_of(c * chunk, chunk)
        xc = x_ref[pl.ds(j, chunk), :].astype(jnp.float32)        # (chunk, in)

        # h^T = W1 @ xc^T : contract dim 1 of both operands (MXU "NT" matmul),
        # so no wrapper-side transpose pass is needed (feedback #2).
        h = lax.dot_general(w1_ref[...], xc, (((1,), (1,)), ((), ())),
                            preferred_element_type=jnp.float32)   # (h0, chunk)
        h = _gelu(h + b1_ref[...], gelu_approx)

        # LayerNorm over features (sublane axis -> cheap XLU reduce), eps=1e-5.
        mu = jnp.mean(h, axis=0, keepdims=True)                   # (1, chunk)
        var = jnp.mean(jnp.square(h - mu), axis=0, keepdims=True)
        h = (h - mu) * lax.rsqrt(var + 1e-5)
        h = h * g_ref[...] + beta_ref[...]                        # lane bcast

        # Linear 2 + GELU (native MXU orientation).
        h = _gelu(jnp.dot(w2_ref[...], h, preferred_element_type=jnp.float32)
                  + b2_ref[...], gelu_approx)                     # (h1, chunk)

        # Output Linear; lane-dense store.
        o = jnp.dot(w3_ref[...], h, preferred_element_type=jnp.float32) + b3_ref[...]
        o_ref[:, pl.ds(j, chunk)] = o.astype(o_ref.dtype)
        return carry

    # feedback #8: chunked inner loop bounds vreg live ranges; unroll for LLO.
    lax.fori_loop(0, nchunks, body, 0, unroll=True)


def mlp_forward(x, params, *, block_b=2048, gelu_approx=False):
    """x: (B, in_dim) natural layout.  params: PyTorch-layout weights."""
    B, in_dim = x.shape
    h0 = params["w1"].shape[0]
    h1 = params["w2"].shape[0]
    out_dim = params["w3"].shape[0]

    # Tile selection (feedback #1, #6, #7): large tile, but never bigger than
    # the batch needs, and small enough that the grid has >=2 "parallel" steps
    # (v7x has 2 TensorCores) whenever B > 128.
    bb = max(128, min(_round_up(max(block_b, 1), 128),
                      _round_up(B, 128),
                      _round_up(_cdiv(B, 2), 128)))
    grid = (_cdiv(B, bb),)
    chunk = 256 if bb % 256 == 0 else 128       # lane-chunk for the inner loop

    const = lambda shape: pl.BlockSpec(shape, lambda i: (0, 0))
    param_bytes = sum(int(v.size) for v in params.values()) * 4
    cost = pl.CostEstimate(                      # feedback #9
        flops=2 * B * (in_dim * h0 + h0 * h1 + h1 * out_dim),
        transcendentals=B * (h0 + h1),
        bytes_accessed=B * (in_dim + out_dim) * x.dtype.itemsize + param_bytes)

    out_t = pl.pallas_call(
        functools.partial(mlp_kernel, chunk=chunk, gelu_approx=gelu_approx),
        out_shape=jax.ShapeDtypeStruct((out_dim, B), x.dtype),
        grid_spec=pltpu.PrefetchScalarGridSpec(
            num_scalar_prefetch=0,
            grid=grid,
            in_specs=[
                pl.BlockSpec((bb, in_dim), lambda i: (i, 0)),   # x, natural
                const((h0, in_dim)),     # w1 (resident: constant index_map)
                const((h0, 1)),          # b1
                const((h0, 1)),          # ln gamma
                const((h0, 1)),          # ln beta
                const((h1, h0)),         # w2
                const((h1, 1)),          # b2
                const((out_dim, h1)),    # w3
                const((out_dim, 1)),     # b3
            ],
            out_specs=pl.BlockSpec((out_dim, bb), lambda i: (0, i)),
        ),
        compiler_params=pltpu.CompilerParams(
            dimension_semantics=("parallel",)),
        cost_estimate=cost,
    )(x, params["w1"], params["b1"], params["gamma"], params["beta"],
      params["w2"], params["b2"], params["w3"], params["b3"])

    # Only remaining wrapper layout op: (out_dim, B) -> (B, out_dim), 64 B/row.
    return out_t.T


def init_params(key, in_dim, hidden_dims, out_dim):
    """Deterministic synthetic init, PyTorch nn.Linear layout (out, in)."""
    dims = [in_dim] + list(hidden_dims) + [out_dim]
    ks = jax.random.split(key, 2 * (len(dims) - 1))
    params = {}
    names = ["1", "2", "3"]
    for idx, (di, do) in enumerate(zip(dims[:-1], dims[1:])):
        bound = 1.0 / float(di) ** 0.5
        w = jax.random.uniform(ks[2 * idx], (do, di), jnp.float32, -bound, bound)
        b = jax.random.uniform(ks[2 * idx + 1], (do, 1), jnp.float32, -bound, bound)
        params["w" + names[idx]] = w
        params["b" + names[idx]] = b
    # LayerNorm affine params (PyTorch init = ones / zeros), kept (D, 1).
    params["gamma"] = jnp.ones((hidden_dims[0], 1), jnp.float32)
    params["beta"] = jnp.zeros((hidden_dims[0], 1), jnp.float32)
    return params


def mlp_reference(x, p, gelu_approx=False):
    """Pure-JAX reference of the same forward (PyTorch weight layout)."""
    h = _gelu(x @ p["w1"].T + p["b1"].T, gelu_approx)
    mu = jnp.mean(h, -1, keepdims=True)
    var = jnp.mean(jnp.square(h - mu), -1, keepdims=True)
    h = (h - mu) * lax.rsqrt(var + 1e-5) * p["gamma"].T + p["beta"].T
    h = _gelu(h @ p["w2"].T + p["b2"].T, gelu_approx)
    return h @ p["w3"].T + p["b3"].T


if __name__ == "__main__":
    in_dim, hidden_dims, out_dim = 32, [32, 32], 8
    key = jax.random.PRNGKey(0)
    kx, kp, kx2 = jax.random.split(key, 3)
    params = init_params(kp, in_dim, hidden_dims, out_dim)

    # Small batch, deliberately NOT a multiple of 128: exercises the masked
    # boundary block and the small-batch tile clamp (2-step grid).
    x = jax.random.normal(kx, (200, in_dim), jnp.float32)
    out = jax.block_until_ready(mlp_forward(x, params))
    assert out.shape == (200, out_dim)
    ref = mlp_reference(x, params)
    assert jnp.allclose(out, ref, atol=1e-4, rtol=1e-4), "mismatch (B=200)"

    # Larger batch: multi-step grid + multi-chunk inner loop.
    x2 = jax.random.normal(kx2, (1000, in_dim), jnp.float32)
    out2 = jax.block_until_ready(mlp_forward(x2, params))
    ref2 = mlp_reference(x2, params)
    assert jnp.allclose(out2, ref2, atol=1e-4, rtol=1e-4), "mismatch (B=1000)"

    # Perf option per review (feedback #3): tanh-GELU on the EUP slot.  It
    # deviates slightly from nn.GELU()'s exact erf, so it is opt-in; verified
    # against a matching tanh-GELU reference.
    out3 = jax.block_until_ready(mlp_forward(x2, params, gelu_approx=True))
    ref3 = mlp_reference(x2, params, gelu_approx=True)
    assert jnp.allclose(out3, ref3, atol=1e-4, rtol=1e-4), "mismatch (tanh GELU)"

    print("KERNEL_OK")
</pallas_src>

<mosaic_0001>
module attributes {stable_mosaic.version = 11 : i64} {
  func.func @mlp_kernel(%arg0: i32, %arg1: memref<128x32xf32, #tpu.memory_space<vmem>>, %arg2: memref<32x32xf32, #tpu.memory_space<vmem>>, %arg3: memref<32x1xf32, #tpu.memory_space<vmem>>, %arg4: memref<32x1xf32, #tpu.memory_space<vmem>>, %arg5: memref<32x1xf32, #tpu.memory_space<vmem>>, %arg6: memref<32x32xf32, #tpu.memory_space<vmem>>, %arg7: memref<32x1xf32, #tpu.memory_space<vmem>>, %arg8: memref<8x32xf32, #tpu.memory_space<vmem>>, %arg9: memref<8x1xf32, #tpu.memory_space<vmem>>, %arg10: memref<8x128xf32, #tpu.memory_space<vmem>>) attributes {dimension_semantics = [#tpu.dimension_semantics<parallel>], iteration_bounds = array<i64: 2>, scalar_prefetch = 0 : i64, scratch_operands = 0 : i64, tpu.core_type = #tpu.core_type<tc>, window_params = [{transform_indices = @transform_0, window_bounds = array<i64: 128, 32>}, {pipeline_mode = #tpu.pipeline_mode<synchronous>, transform_indices = @transform_1, window_bounds = array<i64: 32, 32>}, {pipeline_mode = #tpu.pipeline_mode<synchronous>, transform_indices = @transform_2, window_bounds = array<i64: 32, 1>}, {pipeline_mode = #tpu.pipeline_mode<synchronous>, transform_indices = @transform_3, window_bounds = array<i64: 32, 1>}, {pipeline_mode = #tpu.pipeline_mode<synchronous>, transform_indices = @transform_4, window_bounds = array<i64: 32, 1>}, {pipeline_mode = #tpu.pipeline_mode<synchronous>, transform_indices = @transform_5, window_bounds = array<i64: 32, 32>}, {pipeline_mode = #tpu.pipeline_mode<synchronous>, transform_indices = @transform_6, window_bounds = array<i64: 32, 1>}, {pipeline_mode = #tpu.pipeline_mode<synchronous>, transform_indices = @transform_7, window_bounds = array<i64: 8, 32>}, {pipeline_mode = #tpu.pipeline_mode<synchronous>, transform_indices = @transform_8, window_bounds = array<i64: 8, 1>}, {transform_indices = @transform_9, window_bounds = array<i64: 8, 128>}]} {
    %c0_i32 = arith.constant 0 : i32
    %c128_i32 = arith.constant 128 : i32
    %0 = arith.muli %c0_i32, %c128_i32 : i32
    %1 = tpu.assume_multiple %0, 128 : i32
    %2 = arith.index_cast %1 : i32 to index
    %c0 = arith.constant 0 : index
    %3 = vector.load %arg1[%2, %c0] : memref<128x32xf32, #tpu.memory_space<vmem>>, vector<128x32xf32>
    %c0_0 = arith.constant 0 : index
    %c0_1 = arith.constant 0 : index
    %4 = vector.load %arg2[%c0_0, %c0_1] : memref<32x32xf32, #tpu.memory_space<vmem>>, vector<32x32xf32>
    %cst = arith.constant dense<0.000000e+00> : vector<32x128xf32>
    %5 = tpu.matmul %4, %3, %cst {dimension_numbers = #tpu.dot_dimension_numbers<[1], [1], [0], [0], [0, 0, 1, 0], [], []>} : vector<32x32xf32>, vector<128x32xf32>, vector<32x128xf32> -> vector<32x128xf32>
    %c0_2 = arith.constant 0 : index
    %c0_3 = arith.constant 0 : index
    %6 = vector.load %arg3[%c0_2, %c0_3] : memref<32x1xf32, #tpu.memory_space<vmem>>, vector<32x1xf32>
    %7 = vector.broadcast %6 : vector<32x1xf32> to vector<32x128xf32>
    %8 = arith.addf %5, %7 : vector<32x128xf32>
    %cst_4 = arith.constant 5.000000e-01 : f32
    %9 = vector.broadcast %cst_4 : f32 to vector<32x128xf32>
    %10 = arith.mulf %9, %8 : vector<32x128xf32>
    %cst_5 = arith.constant 0.707106769 : f32
    %11 = vector.broadcast %cst_5 : f32 to vector<32x128xf32>
    %12 = arith.mulf %8, %11 : vector<32x128xf32>
    %13 = math.erf %12 : vector<32x128xf32>
    %cst_6 = arith.constant 1.000000e+00 : f32
    %14 = vector.broadcast %cst_6 : f32 to vector<32x128xf32>
    %15 = arith.addf %14, %13 : vector<32x128xf32>
    %16 = arith.mulf %10, %15 : vector<32x128xf32>
    %cst_7 = arith.constant dense<0.000000e+00> : vector<128xf32>
    %17 = vector.multi_reduction <add>, %16, %cst_7 [0] : vector<32x128xf32> to vector<128xf32>
    %18 = vector.shape_cast %17 : vector<128xf32> to vector<1x128xf32>
    %cst_8 = arith.constant 3.200000e+01 : f32
    %19 = vector.broadcast %cst_8 : f32 to vector<1x128xf32>
    %20 = arith.divf %18, %19 : vector<1x128xf32>
    %21 = vector.broadcast %20 : vector<1x128xf32> to vector<32x128xf32>
    %22 = arith.subf %16, %21 : vector<32x128xf32>
    %23 = arith.mulf %22, %22 : vector<32x128xf32>
    %cst_9 = arith.constant dense<0.000000e+00> : vector<128xf32>
    %24 = vector.multi_reduction <add>, %23, %cst_9 [0] : vector<32x128xf32> to vector<128xf32>
    %25 = vector.shape_cast %24 : vector<128xf32> to vector<1x128xf32>
    %cst_10 = arith.constant 3.200000e+01 : f32
    %26 = vector.broadcast %cst_10 : f32 to vector<1x128xf32>
    %27 = arith.divf %25, %26 : vector<1x128xf32>
    %28 = vector.broadcast %20 : vector<1x128xf32> to vector<32x128xf32>
    %29 = arith.subf %16, %28 : vector<32x128xf32>
    %cst_11 = arith.constant 9.99999974E-6 : f32
    %30 = vector.broadcast %cst_11 : f32 to vector<1x128xf32>
    %31 = arith.addf %27, %30 : vector<1x128xf32>
    %32 = math.rsqrt %31 : vector<1x128xf32>
    %33 = vector.broadcast %32 : vector<1x128xf32> to vector<32x128xf32>
    %34 = arith.mulf %29, %33 : vector<32x128xf32>
    %c0_12 = arith.constant 0 : index
    %c0_13 = arith.constant 0 : index
    %35 = vector.load %arg4[%c0_12, %c0_13] : memref<32x1xf32, #tpu.memory_space<vmem>>, vector<32x1xf32>
    %36 = vector.broadcast %35 : vector<32x1xf32> to vector<32x128xf32>
    %37 = arith.mulf %34, %36 : vector<32x128xf32>
    %c0_14 = arith.constant 0 : index
    %c0_15 = arith.constant 0 : index
    %38 = vector.load %arg5[%c0_14, %c0_15] : memref<32x1xf32, #tpu.memory_space<vmem>>, vector<32x1xf32>
    %39 = vector.broadcast %38 : vector<32x1xf32> to vector<32x128xf32>
    %40 = arith.addf %37, %39 : vector<32x128xf32>
    %c0_16 = arith.constant 0 : index
    %c0_17 = arith.constant 0 : index
    %41 = vector.load %arg6[%c0_16, %c0_17] : memref<32x32xf32, #tpu.memory_space<vmem>>, vector<32x32xf32>
    %cst_18 = arith.constant dense<0.000000e+00> : vector<32x128xf32>
    %42 = tpu.matmul %41, %40, %cst_18 {dimension_numbers = #tpu.dot_dimension_numbers<[1], [0], [0], [1], [0, 0, 1, 1], [], []>} : vector<32x32xf32>, vector<32x128xf32>, vector<32x128xf32> -> vector<32x128xf32>
    %c0_19 = arith.constant 0 : index
    %c0_20 = arith.constant 0 : index
    %43 = vector.load %arg7[%c0_19, %c0_20] : memref<32x1xf32, #tpu.memory_space<vmem>>, vector<32x1xf32>
    %44 = vector.broadcast %43 : vector<32x1xf32> to vector<32x128xf32>
    %45 = arith.addf %42, %44 : vector<32x128xf32>
    %cst_21 = arith.constant 5.000000e-01 : f32
    %46 = vector.broadcast %cst_21 : f32 to vector<32x128xf32>
    %47 = arith.mulf %46, %45 : vector<32x128xf32>
    %cst_22 = arith.constant 0.707106769 : f32
    %48 = vector.broadcast %cst_22 : f32 to vector<32x128xf32>
    %49 = arith.mulf %45, %48 : vector<32x128xf32>
    %50 = math.erf %49 : vector<32x128xf32>
    %cst_23 = arith.constant 1.000000e+00 : f32
    %51 = vector.broadcast %cst_23 : f32 to vector<32x128xf32>
    %52 = arith.addf %51, %50 : vector<32x128xf32>
    %53 = arith.mulf %47, %52 : vector<32x128xf32>
    %c0_24 = arith.constant 0 : index
    %c0_25 = arith.constant 0 : index
    %54 = vector.load %arg8[%c0_24, %c0_25] : memref<8x32xf32, #tpu.memory_space<vmem>>, vector<8x32xf32>
    %cst_26 = arith.constant dense<0.000000e+00> : vector<8x128xf32>
    %55 = tpu.matmul %54, %53, %cst_26 {dimension_numbers = #tpu.dot_dimension_numbers<[1], [0], [0], [1], [0, 0, 1, 1], [], []>} : vector<8x32xf32>, vector<32x128xf32>, vector<8x128xf32> -> vector<8x128xf32>
    %c0_27 = arith.constant 0 : index
    %c0_28 = arith.constant 0 : index
    %56 = vector.load %arg9[%c0_27, %c0_28] : memref<8x1xf32, #tpu.memory_space<vmem>>, vector<8x1xf32>
    %57 = vector.broadcast %56 : vector<8x1xf32> to vector<8x128xf32>
    %58 = arith.addf %55, %57 : vector<8x128xf32>
    %c0_29 = arith.constant 0 : index
    %59 = arith.index_cast %1 : i32 to index
    %60 = vector.load %arg10[%c0_29, %59] : memref<8x128xf32, #tpu.memory_space<vmem>>, vector<8x128xf32>
    tpu.vector_store %arg10[%c0_29, %59], %58 {strides = array<i32>} : memref<8x128xf32, #tpu.memory_space<vmem>>, vector<8x128xf32>,
    %c1_i32 = arith.constant 1 : i32
    return
  }
  func.func @transform_0(%arg0: i32) -> (i32, i32) {
    %c0_i32 = arith.constant 0 : i32
    %c0_i32_0 = arith.constant 0 : i32
    return %arg0, %c0_i32 : i32, i32
  }
  func.func @transform_1(%arg0: i32) -> (i32, i32) {
    %c0_i32 = arith.constant 0 : i32
    %c0_i32_0 = arith.constant 0 : i32
    %c0_i32_1 = arith.constant 0 : i32
    return %c0_i32, %c0_i32_0 : i32, i32
  }
  func.func @transform_2(%arg0: i32) -> (i32, i32) {
    %c0_i32 = arith.constant 0 : i32
    %c0_i32_0 = arith.constant 0 : i32
    %c0_i32_1 = arith.constant 0 : i32
    return %c0_i32, %c0_i32_0 : i32, i32
  }
  func.func @transform_3(%arg0: i32) -> (i32, i32) {
    %c0_i32 = arith.constant 0 : i32
    %c0_i32_0 = arith.constant 0 : i32
    %c0_i32_1 = arith.constant 0 : i32
    return %c0_i32, %c0_i32_0 : i32, i32
  }
  func.func @transform_4(%arg0: i32) -> (i32, i32) {
    %c0_i32 = arith.constant 0 : i32
    %c0_i32_0 = arith.constant 0 : i32
    %c0_i32_1 = arith.constant 0 : i32
    return %c0_i32, %c0_i32_0 : i32, i32
  }
  func.func @transform_5(%arg0: i32) -> (i32, i32) {
    %c0_i32 = arith.constant 0 : i32
    %c0_i32_0 = arith.constant 0 : i32
    %c0_i32_1 = arith.constant 0 : i32
    return %c0_i32, %c0_i32_0 : i32, i32
  }
  func.func @transform_6(%arg0: i32) -> (i32, i32) {
    %c0_i32 = arith.constant 0 : i32
    %c0_i32_0 = arith.constant 0 : i32
    %c0_i32_1 = arith.constant 0 : i32
    return %c0_i32, %c0_i32_0 : i32, i32
  }
  func.func @transform_7(%arg0: i32) -> (i32, i32) {
    %c0_i32 = arith.constant 0 : i32
    %c0_i32_0 = arith.constant 0 : i32
    %c0_i32_1 = arith.constant 0 : i32
    return %c0_i32, %c0_i32_0 : i32, i32
  }
  func.func @transform_8(%arg0: i32) -> (i32, i32) {
    %c0_i32 = arith.constant 0 : i32
    %c0_i32_0 = arith.constant 0 : i32
    %c0_i32_1 = arith.constant 0 : i32
    return %c0_i32, %c0_i32_0 : i32, i32
  }
  func.func @transform_9(%arg0: i32) -> (i32, i32) {
    %c0_i32 = arith.constant 0 : i32
    %c0_i32_0 = arith.constant 0 : i32
    return %c0_i32, %arg0 : i32, i32
  }
}

</mosaic_0001>

<llo_original>
// kernel: tpu_custom_call.1
$region0: #{tpu_custom_call.1}
  #allocation0 [shape = 'u32[]', space=smem, size = 0x4, offset = 0x4, fixed_abs, tag = 'smem constant byte address 0x4 - core index']
  #allocation1 [shape = 'u32[144,128]{1,0:T(1,128)}', space=vmem, size = 0x12000, scoped, tag = 'internal scratch']
  %s0 = inlined_call_operand.vmem [shape: f32[200,32], index: 0, kind: input, shape index: {}]
  %s1 = inlined_call_operand.vmem [shape: f32[32,32], index: 1, kind: input, shape index: {}]
  %s2 = inlined_call_operand.vmem [shape: f32[32,1], index: 2, kind: input, shape index: {}]
  %s3 = inlined_call_operand.vmem [shape: f32[32,1], index: 3, kind: input, shape index: {}]
  %s4 = inlined_call_operand.vmem [shape: f32[32,1], index: 4, kind: input, shape index: {}]
  %s5 = inlined_call_operand.vmem [shape: f32[32,32], index: 5, kind: input, shape index: {}]
  %s6 = inlined_call_operand.vmem [shape: f32[32,1], index: 6, kind: input, shape index: {}]
  %s7 = inlined_call_operand.vmem [shape: f32[8,32], index: 7, kind: input, shape index: {}]
  %s8 = inlined_call_operand.vmem [shape: f32[8,1], index: 8, kind: input, shape index: {}]
  %s9 = inlined_call_operand.hbm [shape: f32[8,200], index: 9, kind: output, shape index: {}]
  %s10 = sld [smem:[#allocation0]]
  $region69: #{tpu_custom_call.1} parent=0
    _
  %s12 = ssub.s32 1, %s10
  %s13 = scalar_select 0, %s12, %s10
  $region1: #{tpu_custom_call.1} parent=0
    #allocation2 [shape = 'u8[8192]{0}', space=vmem, size = 0x2000, scoped, tag = 'output window, operand 0']
    #allocation3 [shape = 's32[2]{0}', space=sflag, size = 0x8, scoped, tag = 'scoped memory for tpu_custom_call.1']
    %14 = vsyncpa [#allocation3], 0
    %s15 = scalar_lea.sflag [#allocation3], 1
    %16 = vsyncpa %s15, 0
    loop: start=0, step=1, limit=4
    $region2: #{tpu_custom_call.1} parent=1 // loop_pre_header
      _
    $region3: #{tpu_custom_call.1} parent=1 // loop_header
      %s18 = sphi 0, %s22
      %p19 = scmp.ge.s32.totalorder %s18, 4
      %s28 = sphi 0, %s30
      %s31 = sphi 0, %s28
      %s32 = sphi 0, %s31
      %s48 = sphi 0, %s32
      %s52 = sphi 0, %s52
      %s54 = sphi 0, %s52
      %s55 = sphi 0, %s54
      %s69 = sphi 0, %s55
      %s73 = sphi 0, %s73
      %s75 = sphi 0, %s73
      %s76 = sphi 0, %s75
      %s90 = sphi 0, %s76
      %s94 = sphi 0, %s94
      %s96 = sphi 0, %s94
      %s97 = sphi 0, %s96
      %s111 = sphi 0, %s97
      %s115 = sphi 0, %s115
      %s117 = sphi 0, %s115
      %s118 = sphi 0, %s117
      %s132 = sphi 0, %s118
      %s136 = sphi 0, %s136
      %s138 = sphi 0, %s136
      %s139 = sphi 0, %s138
      %s153 = sphi 0, %s139
      %s157 = sphi 0, %s157
      %s159 = sphi 0, %s157
      %s160 = sphi 0, %s159
      %s174 = sphi 0, %s160
      %s178 = sphi 0, %s178
      %s180 = sphi 0, %s178
      %s181 = sphi 0, %s180
      %s195 = sphi 0, %s181
      %s199 = sphi 0, %s199
      %s201 = sphi 0, %s199
      %s202 = sphi 0, %s201
      %s216 = sphi 0, %s202
      %s222 = sphi 0, %s224
      %s225 = sphi 0, %s222
      %s226 = sphi 0, %s225
      %s242 = sphi 0, %s226
    $region4: #{tpu_custom_call.1} parent=1 // loop_header_branch
      %21 = sbr.rel (%p19) target = $region8
    $region5: #{tpu_custom_call.1} parent=1 // loop_body
      %s23 = ssub.s32 %s18, 1
      %s24 = ssub.s32 %s18, 2
      %s25 = sadd.s32 %s18, 1
      %s26 = ssub.s32 %s18, %s25
      %p27 = scmp.eq.s32.totalorder %s26, 0
      %s29 = sadd.s32 %s28, 1
      %s30 = scalar_select %p27, %s28, %s29
      %p33 = pneg %p27
      %p34 = scmp.eq.s32.totalorder %s18, 1
      %p35 = por %p33, %p34
      %p36 = scmp.ne.s32.totalorder %s28, %s31
      %p37 = scmp.eq.s32.totalorder %s18, 0
      %p38 = por %p36, %p37
      %p39 = scmp.ne.s32.totalorder %s28, %s31
      %p40 = scmp.eq.s32.totalorder %s23, 1
      %p41 = por %p39, %p40
      %p42 = scmp.ne.s32.totalorder %s31, %s32
      %p43 = scmp.eq.s32.totalorder %s23, 0
      %p44 = por %p42, %p43
      %p45 = scmp.ne.s32.totalorder %s31, %s32
      %p46 = scmp.eq.s32.totalorder %s24, 1
      %p47 = por %p45, %p46
      %p49 = scmp.ne.s32.totalorder %s32, %s48
      %p50 = scmp.eq.s32.totalorder %s24, 0
      %p51 = por %p49, %p50
      %s53 = sadd.s32 %s52, 1
      %p56 = scmp.eq.s32.totalorder %s18, 1
      %p57 = scmp.ne.s32.totalorder %s52, %s54
      %p58 = scmp.eq.s32.totalorder %s18, 0
      %p59 = por %p57, %p58
      %p60 = scmp.ne.s32.totalorder %s52, %s54
      %p61 = scmp.eq.s32.totalorder %s23, 1
      %p62 = por %p60, %p61
      %p63 = scmp.ne.s32.totalorder %s54, %s55
      %p64 = scmp.eq.s32.totalorder %s23, 0
      %p65 = por %p63, %p64
      %p66 = scmp.ne.s32.totalorder %s54, %s55
      %p67 = scmp.eq.s32.totalorder %s24, 1
      %p68 = por %p66, %p67
      %p70 = scmp.ne.s32.totalorder %s55, %s69
      %p71 = scmp.eq.s32.totalorder %s24, 0
      %p72 = por %p70, %p71
      %s74 = sadd.s32 %s73, 1
      %p77 = scmp.eq.s32.totalorder %s18, 1
      %p78 = scmp.ne.s32.totalorder %s73, %s75
      %p79 = scmp.eq.s32.totalorder %s18, 0
      %p80 = por %p78, %p79
      %p81 = scmp.ne.s32.totalorder %s73, %s75
      %p82 = scmp.eq.s32.totalorder %s23, 1
      %p83 = por %p81, %p82
      %p84 = scmp.ne.s32.totalorder %s75, %s76
      %p85 = scmp.eq.s32.totalorder %s23, 0
      %p86 = por %p84, %p85
      %p87 = scmp.ne.s32.totalorder %s75, %s76
      %p88 = scmp.eq.s32.totalorder %s24, 1
      %p89 = por %p87, %p88
      %p91 = scmp.ne.s32.totalorder %s76, %s90
      %p92 = scmp.eq.s32.totalorder %s24, 0
      %p93 = por %p91, %p92
      %s95 = sadd.s32 %s94, 1
      %p98 = scmp.eq.s32.totalorder %s18, 1
      %p99 = scmp.ne.s32.totalorder %s94, %s96
      %p100 = scmp.eq.s32.totalorder %s18, 0
      %p101 = por %p99, %p100
      %p102 = scmp.ne.s32.totalorder %s94, %s96
      %p103 = scmp.eq.s32.totalorder %s23, 1
      %p104 = por %p102, %p103
      %p105 = scmp.ne.s32.totalorder %s96, %s97
      %p106 = scmp.eq.s32.totalorder %s23, 0
      %p107 = por %p105, %p106
      %p108 = scmp.ne.s32.totalorder %s96, %s97
      %p109 = scmp.eq.s32.totalorder %s24, 1
      %p110 = por %p108, %p109
      %p112 = scmp.ne.s32.totalorder %s97, %s111
      %p113 = scmp.eq.s32.totalorder %s24, 0
      %p114 = por %p112, %p113
      %s116 = sadd.s32 %s115, 1
      %p119 = scmp.eq.s32.totalorder %s18, 1
      %p120 = scmp.ne.s32.totalorder %s115, %s117
      %p121 = scmp.eq.s32.totalorder %s18, 0
      %p122 = por %p120, %p121
      %p123 = scmp.ne.s32.totalorder %s115, %s117
      %p124 = scmp.eq.s32.totalorder %s23, 1
      %p125 = por %p123, %p124
      %p126 = scmp.ne.s32.totalorder %s117, %s118
      %p127 = scmp.eq.s32.totalorder %s23, 0
      %p128 = por %p126, %p127
      %p129 = scmp.ne.s32.totalorder %s117, %s118
      %p130 = scmp.eq.s32.totalorder %s24, 1
      %p131 = por %p129, %p130
      %p133 = scmp.ne.s32.totalorder %s118, %s132
      %p134 = scmp.eq.s32.totalorder %s24, 0
      %p135 = por %p133, %p134
      %s137 = sadd.s32 %s136, 1
      %p140 = scmp.eq.s32.totalorder %s18, 1
      %p141 = scmp.ne.s32.totalorder %s136, %s138
      %p142 = scmp.eq.s32.totalorder %s18, 0
      %p143 = por %p141, %p142
      %p144 = scmp.ne.s32.totalorder %s136, %s138
      %p145 = scmp.eq.s32.totalorder %s23, 1
      %p146 = por %p144, %p145
      %p147 = scmp.ne.s32.totalorder %s138, %s139
      %p148 = scmp.eq.s32.totalorder %s23, 0
      %p149 = por %p147, %p148
      %p150 = scmp.ne.s32.totalorder %s138, %s139
      %p151 = scmp.eq.s32.totalorder %s24, 1
      %p152 = por %p150, %p151
      %p154 = scmp.ne.s32.totalorder %s139, %s153
      %p155 = scmp.eq.s32.totalorder %s24, 0
      %p156 = por %p154, %p155
      %s158 = sadd.s32 %s157, 1
      %p161 = scmp.eq.s32.totalorder %s18, 1
      %p162 = scmp.ne.s32.totalorder %s157, %s159
      %p163 = scmp.eq.s32.totalorder %s18, 0
      %p164 = por %p162, %p163
      %p165 = scmp.ne.s32.totalorder %s157, %s159
      %p166 = scmp.eq.s32.totalorder %s23, 1
      %p167 = por %p165, %p166
      %p168 = scmp.ne.s32.totalorder %s159, %s160
      %p169 = scmp.eq.s32.totalorder %s23, 0
      %p170 = por %p168, %p169
      %p171 = scmp.ne.s32.totalorder %s159, %s160
      %p172 = scmp.eq.s32.totalorder %s24, 1
      %p173 = por %p171, %p172
      %p175 = scmp.ne.s32.totalorder %s160, %s174
      %p176 = scmp.eq.s32.totalorder %s24, 0
      %p177 = por %p175, %p176
      %s179 = sadd.s32 %s178, 1
      %p182 = scmp.eq.s32.totalorder %s18, 1
      %p183 = scmp.ne.s32.totalorder %s178, %s180
      %p184 = scmp.eq.s32.totalorder %s18, 0
      %p185 = por %p183, %p184
      %p186 = scmp.ne.s32.totalorder %s178, %s180
      %p187 = scmp.eq.s32.totalorder %s23, 1
      %p188 = por %p186, %p187
      %p189 = scmp.ne.s32.totalorder %s180, %s181
      %p190 = scmp.eq.s32.totalorder %s23, 0
      %p191 = por %p189, %p190
      %p192 = scmp.ne.s32.totalorder %s180, %s181
      %p193 = scmp.eq.s32.totalorder %s24, 1
      %p194 = por %p192, %p193
      %p196 = scmp.ne.s32.totalorder %s181, %s195
      %p197 = scmp.eq.s32.totalorder %s24, 0
      %p198 = por %p196, %p197
      %s200 = sadd.s32 %s199, 1
      %p203 = scmp.eq.s32.totalorder %s18, 1
      %p204 = scmp.ne.s32.totalorder %s199, %s201
      %p205 = scmp.eq.s32.totalorder %s18, 0
      %p206 = por %p204, %p205
      %p207 = scmp.ne.s32.totalorder %s199, %s201
      %p208 = scmp.eq.s32.totalorder %s23, 1
      %p209 = por %p207, %p208
      %p210 = scmp.ne.s32.totalorder %s201, %s202
      %p211 = scmp.eq.s32.totalorder %s23, 0
      %p212 = por %p210, %p211
      %p213 = scmp.ne.s32.totalorder %s201, %s202
      %p214 = scmp.eq.s32.totalorder %s24, 1
      %p215 = por %p213, %p214
      %p217 = scmp.ne.s32.totalorder %s202, %s216
      %p218 = scmp.eq.s32.totalorder %s24, 0
      %p219 = por %p217, %p218
      %s220 = ssub.s32 %s18, %s25
      %p221 = scmp.eq.s32.totalorder %s220, 0
      %s223 = sadd.s32 %s222, 1
      %s224 = scalar_select %p221, %s222, %s223
      %p227 = pneg %p221
      %p228 = scmp.eq.s32.totalorder %s18, 1
      %p229 = por %p227, %p228
      %p230 = scmp.ne.s32.totalorder %s222, %s225
      %p231 = scmp.eq.s32.totalorder %s18, 0
      %p232 = por %p230, %p231
      %p233 = scmp.ne.s32.totalorder %s222, %s225
      %p234 = scmp.eq.s32.totalorder %s23, 1
      %p235 = por %p233, %p234
      %p236 = scmp.ne.s32.totalorder %s225, %s226
      %p237 = scmp.eq.s32.totalorder %s23, 0
      %p238 = por %p236, %p237
      %p239 = scmp.ne.s32.totalorder %s225, %s226
      %p240 = scmp.eq.s32.totalorder %s24, 1
      %p241 = por %p239, %p240
      %p243 = scmp.ne.s32.totalorder %s226, %s242
      %p244 = scmp.eq.s32.totalorder %s24, 0
      %p245 = por %p243, %p244
      %p246 = scmp.le.s32.totalorder 1, %s18
      %p247 = scmp.lt.s32.totalorder %s18, 3
      %p248 = pnand %p246, %p247
      %p249 = pneg %p248
      // Predicated region
      $region9: #{tpu_custom_call.1} parent=5 // pred_check
        _
      $region10: #{tpu_custom_call.1} parent=5 // pred_check_branch
        %251 = sbr.rel (%p248) target = $region12
      $region11: #{tpu_custom_call.1} parent=5 // pred_region
        %s252 = ssub.s32 %s18, 1
        // Predicated region
        $region13: #{tpu_custom_call.1} parent=11 // pred_check
          %p253 = pneg %p65
        $region14: #{tpu_custom_call.1} parent=11 // pred_check_branch
          %255 = sbr.rel (%p253) target = $region16
        $region15: #{tpu_custom_call.1} parent=11 // pred_region
          _
        $region16: #{tpu_custom_call.1} parent=11 // pred_fallthru
          _
        // Predicated region
        $region17: #{tpu_custom_call.1} parent=11 // pred_check
          %p256 = pneg %p86
        $region18: #{tpu_custom_call.1} parent=11 // pred_check_branch
          %258 = sbr.rel (%p256) target = $region20
        $region19: #{tpu_custom_call.1} parent=11 // pred_region
          _
        $region20: #{tpu_custom_call.1} parent=11 // pred_fallthru
          _
        // Predicated region
        $region21: #{tpu_custom_call.1} parent=11 // pred_check
          %p259 = pneg %p107
        $region22: #{tpu_custom_call.1} parent=11 // pred_check_branch
          %261 = sbr.rel (%p259) target = $region24
        $region23: #{tpu_custom_call.1} parent=11 // pred_region
          _
        $region24: #{tpu_custom_call.1} parent=11 // pred_fallthru
          _
        // Predicated region
        $region25: #{tpu_custom_call.1} parent=11 // pred_check
          %p262 = pneg %p128
        $region26: #{tpu_custom_call.1} parent=11 // pred_check_branch
          %264 = sbr.rel (%p262) target = $region28
        $region27: #{tpu_custom_call.1} parent=11 // pred_region
          _
        $region28: #{tpu_custom_call.1} parent=11 // pred_fallthru
          _
        // Predicated region
        $region29: #{tpu_custom_call.1} parent=11 // pred_check
          %p265 = pneg %p149
        $region30: #{tpu_custom_call.1} parent=11 // pred_check_branch
          %267 = sbr.rel (%p265) target = $region32
        $region31: #{tpu_custom_call.1} parent=11 // pred_region
          _
        $region32: #{tpu_custom_call.1} parent=11 // pred_fallthru
          _
        // Predicated region
        $region33: #{tpu_custom_call.1} parent=11 // pred_check
          %p268 = pneg %p170
        $region34: #{tpu_custom_call.1} parent=11 // pred_check_branch
          %270 = sbr.rel (%p268) target = $region36
        $region35: #{tpu_custom_call.1} parent=11 // pred_region
          _
        $region36: #{tpu_custom_call.1} parent=11 // pred_fallthru
          _
        // Predicated region
        $region37: #{tpu_custom_call.1} parent=11 // pred_check
          %p271 = pneg %p191
        $region38: #{tpu_custom_call.1} parent=11 // pred_check_branch
          %273 = sbr.rel (%p271) target = $region40
        $region39: #{tpu_custom_call.1} parent=11 // pred_region
          _
        $region40: #{tpu_custom_call.1} parent=11 // pred_fallthru
          _
        // Predicated region
        $region41: #{tpu_custom_call.1} parent=11 // pred_check
          %p274 = pneg %p212
        $region42: #{tpu_custom_call.1} parent=11 // pred_check_branch
          %276 = sbr.rel (%p274) target = $region44
        $region43: #{tpu_custom_call.1} parent=11 // pred_region
          _
        $region44: #{tpu_custom_call.1} parent=11 // pred_fallthru
          _
      $region12: #{tpu_custom_call.1} parent=5 // pred_fallthru
        _
      %p277 = scmp.lt.s32.totalorder %s18, 2
      // Predicated region
      $region45: #{tpu_custom_call.1} parent=5 // pred_check
        %p278 = pneg %p277
      $region46: #{tpu_custom_call.1} parent=5 // pred_check_branch
        %280 = sbr.rel (%p278) target = $region48
      $region47: #{tpu_custom_call.1} parent=5 // pred_region
        // Predicated region
        $region49: #{tpu_custom_call.1} parent=47 // pred_check
          %p281 = pneg %p38
        $region50: #{tpu_custom_call.1} parent=47 // pred_check_branch
          %283 = sbr.rel (%p281) target = $region52
        $region51: #{tpu_custom_call.1} parent=47 // pred_region
          %s284 = smul.u32 16, %s18
          %s285 = ssub.s32 25, %s284
          %p286 = scmp.lt.s32.totalorder %s285, 16
          %s287 = scalar_select %p286, %s285, 16
          %s288 = smul.u32 128, %s287
          %p289 = scmp.lt.s32.totalorder %s284, 24
          %s290 = scalar_select %p289, %s284, 24
          %s291 = smul.addr %s290, 8
          %s292 = scalar_lea.vmem %s0, %s291
          %s293 = smul.u32 16, %s18
          %s294 = ssub.s32 25, %s293
          %p295 = scmp.lt.s32.totalorder %s294, 16
          %s296 = scalar_select %p295, %s294, 16
          %s297 = smul.u32 128, %s296
        $region52: #{tpu_custom_call.1} parent=47 // pred_fallthru
          _
      $region48: #{tpu_custom_call.1} parent=5 // pred_fallthru
        _
      %p298 = scmp.le.s32.totalorder 1, %s18
      %p299 = scmp.lt.s32.totalorder %s18, 3
      %p300 = pnand %p298, %p299
      %p301 = pneg %p300
      // Predicated region
      $region53: #{tpu_custom_call.1} parent=5 // pred_check
        _
      $region54: #{tpu_custom_call.1} parent=5 // pred_check_branch
        %303 = sbr.rel (%p300) target = $region56
      $region55: #{tpu_custom_call.1} parent=5 // pred_region
        %s304 = ssub.s32 %s18, 1
        %s305 = smul.u32 16, %s23
        %s306 = ssub.s32 25, %s305
        %p307 = scmp.lt.s32.totalorder %s306, 16
        %s308 = scalar_select %p307, %s306, 16
        %s309 = smul.u32 128, %s308
        %p310 = scmp.lt.s32.totalorder %s305, 24
        %s311 = scalar_select %p310, %s305, 24
        %s312 = smul.addr %s311, 8
        %s313 = scalar_lea.vmem %s0, %s312
        %p314 = pneg %p44
        %p315 = pneg %p41
        %p316 = pneg %p65
        %p317 = pneg %p62
        %p318 = pneg %p86
        %p319 = pneg %p83
        %p320 = pneg %p107
        %p321 = pneg %p104
        %p322 = pneg %p128
        %p323 = pneg %p125
        %p324 = pneg %p149
        %p325 = pneg %p146
        %p326 = pneg %p170
        %p327 = pneg %p167
        %p328 = pneg %p191
        %p329 = pneg %p188
        %p330 = pneg %p212
        %p331 = pneg %p209
        %p332 = pneg %p238
        %p333 = pneg %p235
        %s334 = sand.u32 %s225, 1
        %s335 = scalar_lea.sflag [#allocation3], %s334
        %s336 = sand.u32 %s225, 1
        %s337 = smul.addr %s336, 8
        %s338 = scalar_lea.vmem [#allocation2], %s337
        %s339 = smul.u32 16, %s23
        %s340 = ssub.s32 25, %s339
        %p341 = scmp.lt.s32.totalorder %s340, 16
        %s342 = scalar_select %p341, %s340, 16
        %s343 = smul.u32 128, %s342
        %p344 = scmp.lt.s32.totalorder %s339, 24
        %s345 = scalar_select %p344, %s339, 24
        %s346 = smul.addr %s345, 8
        %s347 = scalar_lea.vmem %s0, %s346
        %s348 = smul.u32 16, %s23
        %s349 = ssub.s32 25, %s348
        %p350 = scmp.lt.s32.totalorder %s349, 16
        %s351 = scalar_select %p350, %s349, 16
        %s352 = smul.u32 128, %s351
        %v353 = vld [vmem:[%s347] sm:$0xff]
        %v354 = vld [vmem:[%s347 + $0x8] sm:$0xff]
        %v355 = vld [vmem:[%s347 + $0x10] sm:$0xff]
        %v356 = vld [vmem:[%s347 + $0x18] sm:$0xff]
        %v357 = vld [vmem:[%s347 + $0x20] sm:$0xff]
        %v358 = vld [vmem:[%s347 + $0x28] sm:$0xff]
        %v359 = vld [vmem:[%s347 + $0x30] sm:$0xff]
        %v360 = vld [vmem:[%s347 + $0x38] sm:$0xff]
        %v361 = vld [vmem:[%s347 + $0x40] sm:$0xff]
        %v362 = vld [vmem:[%s347 + $0x48] sm:$0xff]
        %v363 = vld [vmem:[%s347 + $0x50] sm:$0xff]
        %v364 = vld [vmem:[%s347 + $0x58] sm:$0xff]
        %v365 = vld [vmem:[%s347 + $0x60] sm:$0xff]
        %v366 = vld [vmem:[%s347 + $0x68] sm:$0xff]
        %v367 = vld [vmem:[%s347 + $0x70] sm:$0xff]
        %v368 = vld [vmem:[%s347 + $0x78] sm:$0xff]
        %v369 = vld [vmem:[%s1] sm:$0xff]
        %v370 = vld [vmem:[%s1 + $0x8] sm:$0xff]
        %v371 = vld [vmem:[%s1 + $0x10] sm:$0xff]
        %v372 = vld [vmem:[%s1 + $0x18] sm:$0xff]
        %v373 = vld [vmem:[%s2] sm:$0xff]
        %v374 = vld [vmem:[%s2 + $0x8] sm:$0xff]
        %v375 = vld [vmem:[%s2 + $0x10] sm:$0xff]
        %v376 = vld [vmem:[%s2 + $0x18] sm:$0xff]
        %378 = vset.pattern.permute.xlu0 0
        %379 = vperm.xlu0 %378, %v373
        %v380 = vpop.permute.xlu0 %379
        %383 = vset.pattern.permute.xlu0 0
        %384 = vperm.xlu0 %383, %v374
        %v385 = vpop.permute.xlu0 %384
        %388 = vset.pattern.permute.xlu0 0
        %389 = vperm.xlu0 %388, %v375
        %v390 = vpop.permute.xlu0 %389
        %393 = vset.pattern.permute.xlu0 0
        %394 = vperm.xlu0 %393, %v376
        %v395 = vpop.permute.xlu0 %394
        %vm397 = vcmask 261120
        %v399 = vsel %vm397, %v369, 0
        %v402 = vsel %vm397, %v370, 0
        %v405 = vsel %vm397, %v371, 0
        %v408 = vsel %vm397, %v372, 0
        %v411 = vsel %vm397, %v353, 0
        %v414 = vsel %vm397, %v354, 0
        %v417 = vsel %vm397, %v355, 0
        %v420 = vsel %vm397, %v356, 0
        %v423 = vsel %vm397, %v357, 0
        %v426 = vsel %vm397, %v358, 0
        %v429 = vsel %vm397, %v359, 0
        %v432 = vsel %vm397, %v360, 0
        %v435 = vsel %vm397, %v361, 0
        %v438 = vsel %vm397, %v362, 0
        %v441 = vsel %vm397, %v363, 0
        %v444 = vsel %vm397, %v364, 0
        %v447 = vsel %vm397, %v365, 0
        %v450 = vsel %vm397, %v366, 0
        %v453 = vsel %vm397, %v367, 0
        %v456 = vsel %vm397, %v368, 0
        %458 = vmatprep.subr.mxu0 0.0
        %459 = vmatpush1.xpose.msra.mxu0 %v456
        %460 = vmatprep.subr.mxu0 0.0
        %461 = vmatpush1.xpose.msra.mxu0 %v453
        %462 = vmatprep.subr.mxu0 0.0
        %463 = vmatpush1.xpose.msra.mxu0 %v450
        %464 = vmatprep.subr.mxu0 0.0
        %465 = vmatpush1.xpose.msra.mxu0 %v447
        %466 = vmatprep.subr.mxu0 0.0
        %467 = vmatpush1.xpose.msra.mxu0 %v444
        %468 = vmatprep.subr.mxu0 0.0
        %469 = vmatpush1.xpose.msra.mxu0 %v441
        %470 = vmatprep.subr.mxu0 0.0
        %471 = vmatpush1.xpose.msra.mxu0 %v438
        %472 = vmatprep.subr.mxu0 0.0
        %473 = vmatpush1.xpose.msra.mxu0 %v435
        %474 = vmatprep.subr.mxu0 0.0
        %475 = vmatpush1.xpose.msra.mxu0 %v432
        %476 = vmatprep.subr.mxu0 0.0
        %477 = vmatpush1.xpose.msra.mxu0 %v429
        %478 = vmatprep.subr.mxu0 0.0
        %479 = vmatpush1.xpose.msra.mxu0 %v426
        %480 = vmatprep.subr.mxu0 0.0
        %481 = vmatpush1.xpose.msra.mxu0 %v423
        %482 = vmatprep.subr.mxu0 0.0
        %483 = vmatpush1.xpose.msra.mxu0 %v420
        %484 = vmatprep.subr.mxu0 0.0
        %485 = vmatpush1.xpose.msra.mxu0 %v417
        %486 = vmatprep.subr.mxu0 0.0
        %487 = vmatpush1.xpose.msra.mxu0 %v414
        %488 = vmatprep.subr.mxu0 0.0
        %489 = vmatpush1.xpose.msra.mxu0 %v411
        %490 = vmatprep.subr.mxu0 0.0
        %491 = vmatpush2.xpose.msra.mxu0 0.0
        %492 = vmatprep.subr.mxu0 0.0
        %493 = vmatpush2.xpose.msra.mxu0 0.0
        %494 = vmatprep.subr.mxu0 0.0
        %495 = vmatpush2.xpose.msra.mxu0 0.0
        %496 = vmatprep.subr.mxu0 0.0
        %497 = vmatpush2.xpose.msra.mxu0 0.0
        %498 = vmatprep.subr.mxu0 0.0
        %499 = vmatpush2.xpose.msra.mxu0 0.0
        %500 = vmatprep.subr.mxu0 0.0
        %501 = vmatpush2.xpose.msra.mxu0 0.0
        %502 = vmatprep.subr.mxu0 0.0
        %503 = vmatpush2.xpose.msra.mxu0 0.0
        %504 = vmatprep.subr.mxu0 0.0
        %505 = vmatpush2.xpose.msra.mxu0 0.0
        %506 = vmatprep.subr.mxu0 0.0
        %507 = vmatpush2.xpose.msra.mxu0 0.0
        %508 = vmatprep.subr.mxu0 0.0
        %509 = vmatpush2.xpose.msra.mxu0 0.0
        %510 = vmatprep.subr.mxu0 0.0
        %511 = vmatpush2.xpose.msra.mxu0 0.0
        %512 = vmatprep.subr.mxu0 0.0
        %513 = vmatpush2.xpose.msra.mxu0 0.0
        %514 = vmatprep.subr.mxu0 0.0
        %515 = vmatpush2.xpose.msra.mxu0 0.0
        %516 = vmatprep.subr.mxu0 0.0
        %517 = vmatpush2.xpose.msra.mxu0 0.0
        %518 = vmatprep.subr.mxu0 0.0
        %519 = vmatpush2.xpose.msra.mxu0 0.0
        %520 = vmatprep.subr.mxu0 0.0
        %521 = vmatpush2.xpose.msra.mxu0 0.0
        %522 = vmatprep.mubr.f32.mxu0 0.0
        %523 = vmatmul.mubr.f32.gmra.mxu0 %v399
        %v524 = vpop.f32.mrf.mxu0
        %v525 = vadd.f32 %v380, %v524
        %v526 = vpop.f32.mrf.mxu0
        %527 = vmatprep.mubr.f32.mxu0 0.0
        %528 = vmatmul.mubr.f32.gmra.mxu0 %v402
        %v529 = vpop.f32.mrf.mxu0
        %v530 = vadd.f32 %v385, %v529
        %v531 = vpop.f32.mrf.mxu0
        %532 = vmatprep.mubr.f32.mxu0 0.0
        %533 = vmatmul.mubr.f32.gmra.mxu0 %v405
        %v534 = vpop.f32.mrf.mxu0
        %v535 = vadd.f32 %v390, %v534
        %v536 = vpop.f32.mrf.mxu0
        %537 = vmatprep.mubr.f32.mxu0 0.0
        %538 = vmatmul.mubr.f32.gmra.mxu0 %v408
        %v539 = vpop.f32.mrf.mxu0
        %v540 = vadd.f32 %v395, %v539
        %v541 = vpop.f32.mrf.mxu0
        %542 = vdwg.mxu0
        %v543 = vmul.f32 %v525, 0.5
        %v544 = vmul.f32 %v530, 0.5
        %v545 = vmul.f32 %v535, 0.5
        %v546 = vmul.f32 %v540, 0.5
        %v547 = vmul.f32 %v525, 0.70710677
        %v548 = vmul.f32 %v530, 0.70710677
        %v549 = vmul.f32 %v535, 0.70710677
        %v550 = vmul.f32 %v540, 0.70710677
        %v551 = verf.f32.pop %v547
        %v552 = verf.f32.pop %v548
        %v553 = verf.f32.pop %v549
        %v554 = verf.f32.pop %v550
        %v555 = vadd.f32 %v551, 1.0
        %v556 = vadd.f32 %v552, 1.0
        %v557 = vadd.f32 %v553, 1.0
        %v558 = vadd.f32 %v554, 1.0
        %v559 = vmul.f32 %v543, %v555
        %v560 = vmul.f32 %v544, %v556
        %v561 = vmul.f32 %v545, %v557
        %v562 = vmul.f32 %v546, %v558
        %v563 = vadd.f32 %v559, %v560
        %v564 = vadd.f32 %v563, %v561
        %v565 = vadd.f32 %v564, %v562
        %v566 = vrot.slane %v565, 4
        %v567 = vadd.f32 %v565, %v566
        %v568 = vrot.slane %v567, 2
        %v569 = vadd.f32 %v567, %v568
        %v570 = vrot.slane %v569, 1
        %v571 = vadd.f32 %v569, %v570
        %v572 = vrcp.pop 32.0
        %v573 = vmul.f32 %v571, %v572
        %v574 = vsub.f32 %v559, %v573
        %v575 = vsub.f32 %v560, %v573
        %v576 = vsub.f32 %v561, %v573
        %v577 = vsub.f32 %v562, %v573
        %v578 = vmul.f32 %v574, %v574
        %v579 = vmul.f32 %v575, %v575
        %v580 = vmul.f32 %v576, %v576
        %v581 = vmul.f32 %v577, %v577
        %v582 = vadd.f32 %v578, %v579
        %v583 = vadd.f32 %v582, %v580
        %v584 = vadd.f32 %v583, %v581
        %v585 = vrot.slane %v584, 4
        %v586 = vadd.f32 %v584, %v585
        %v587 = vrot.slane %v586, 2
        %v588 = vadd.f32 %v586, %v587
        %v589 = vrot.slane %v588, 1
        %v590 = vadd.f32 %v588, %v589
        %v591 = vmul.f32 %v590, %v572
        %v592 = vadd.f32 %v591, 1e-05
        %v593 = vrsqrt.pop %v592
        %v594 = vmul.f32 %v574, %v593
        %v595 = vmul.f32 %v575, %v593
        %v596 = vmul.f32 %v576, %v593
        %v597 = vmul.f32 %v577, %v593
        %v598 = vld [vmem:[%s3] sm:$0xff]
        %v599 = vld [vmem:[%s3 + $0x8] sm:$0xff]
        %v600 = vld [vmem:[%s3 + $0x10] sm:$0xff]
        %v601 = vld [vmem:[%s3 + $0x18] sm:$0xff]
        %603 = vset.pattern.permute.xlu0 0
        %604 = vperm.xlu0 %603, %v598
        %v605 = vpop.permute.xlu0 %604
        %608 = vset.pattern.permute.xlu0 0
        %609 = vperm.xlu0 %608, %v599
        %v610 = vpop.permute.xlu0 %609
        %613 = vset.pattern.permute.xlu0 0
        %614 = vperm.xlu0 %613, %v600
        %v615 = vpop.permute.xlu0 %614
        %618 = vset.pattern.permute.xlu0 0
        %619 = vperm.xlu0 %618, %v601
        %v620 = vpop.permute.xlu0 %619
        %v622 = vmul.f32 %v594, %v605
        %v623 = vmul.f32 %v595, %v610
        %v624 = vmul.f32 %v596, %v615
        %v625 = vmul.f32 %v597, %v620
        %v626 = vld [vmem:[%s4] sm:$0xff]
        %v627 = vld [vmem:[%s4 + $0x8] sm:$0xff]
        %v628 = vld [vmem:[%s4 + $0x10] sm:$0xff]
        %v629 = vld [vmem:[%s4 + $0x18] sm:$0xff]
        %631 = vset.pattern.permute.xlu0 0
        %632 = vperm.xlu0 %631, %v626
        %v633 = vpop.permute.xlu0 %632
        %636 = vset.pattern.permute.xlu0 0
        %637 = vperm.xlu0 %636, %v627
        %v638 = vpop.permute.xlu0 %637
        %641 = vset.pattern.permute.xlu0 0
        %642 = vperm.xlu0 %641, %v628
        %v643 = vpop.permute.xlu0 %642
        %646 = vset.pattern.permute.xlu0 0
        %647 = vperm.xlu0 %646, %v629
        %v648 = vpop.permute.xlu0 %647
        %v650 = vadd.f32 %v622, %v633
        %v651 = vadd.f32 %v623, %v638
        %v652 = vadd.f32 %v624, %v643
        %v653 = vadd.f32 %v625, %v648
        %v654 = vld [vmem:[%s5] sm:$0xff]
        %v655 = vld [vmem:[%s5 + $0x8] sm:$0xff]
        %v656 = vld [vmem:[%s5 + $0x10] sm:$0xff]
        %v657 = vld [vmem:[%s5 + $0x18] sm:$0xff]
        %v658 = vld [vmem:[%s6] sm:$0xff]
        %v659 = vld [vmem:[%s6 + $0x8] sm:$0xff]
        %v660 = vld [vmem:[%s6 + $0x10] sm:$0xff]
        %v661 = vld [vmem:[%s6 + $0x18] sm:$0xff]
        %663 = vset.pattern.permute.xlu0 0
        %664 = vperm.xlu0 %663, %v658
        %v665 = vpop.permute.xlu0 %664
        %668 = vset.pattern.permute.xlu0 0
        %669 = vperm.xlu0 %668, %v659
        %v670 = vpop.permute.xlu0 %669
        %673 = vset.pattern.permute.xlu0 0
        %674 = vperm.xlu0 %673, %v660
        %v675 = vpop.permute.xlu0 %674
        %678 = vset.pattern.permute.xlu0 0
        %679 = vperm.xlu0 %678, %v661
        %v680 = vpop.permute.xlu0 %679
        %v683 = vsel %vm397, %v654, 0
        %v686 = vsel %vm397, %v655, 0
        %v689 = vsel %vm397, %v656, 0
        %v692 = vsel %vm397, %v657, 0
        %694 = vmatprep.subr.mxu0 0.0
        %695 = vmatpush1.msra.mxu0 0.0
        %696 = vmatprep.subr.mxu0 0.0
        %697 = vmatpush1.msra.mxu0 0.0
        %698 = vmatprep.subr.mxu0 0.0
        %699 = vmatpush1.msra.mxu0 0.0
        %700 = vmatprep.subr.mxu0 0.0
        %701 = vmatpush1.msra.mxu0 0.0
        %702 = vmatprep.subr.mxu0 0.0
        %703 = vmatpush1.msra.mxu0 0.0
        %704 = vmatprep.subr.mxu0 0.0
        %705 = vmatpush1.msra.mxu0 0.0
        %706 = vmatprep.subr.mxu0 0.0
        %707 = vmatpush1.msra.mxu0 0.0
        %708 = vmatprep.subr.mxu0 0.0
        %709 = vmatpush1.msra.mxu0 0.0
        %710 = vmatprep.subr.mxu0 0.0
        %711 = vmatpush1.msra.mxu0 0.0
        %712 = vmatprep.subr.mxu0 0.0
        %713 = vmatpush1.msra.mxu0 0.0
        %714 = vmatprep.subr.mxu0 0.0
        %715 = vmatpush1.msra.mxu0 0.0
        %716 = vmatprep.subr.mxu0 0.0
        %717 = vmatpush1.msra.mxu0 0.0
        %718 = vmatprep.subr.mxu0 0.0
        %719 = vmatpush1.msra.mxu0 %v653
        %720 = vmatprep.subr.mxu0 0.0
        %721 = vmatpush1.msra.mxu0 %v652
        %722 = vmatprep.subr.mxu0 0.0
        %723 = vmatpush1.msra.mxu0 %v651
        %724 = vmatprep.subr.mxu0 0.0
        %725 = vmatpush1.msra.mxu0 %v650
        %726 = vmatprep.subr.mxu0 0.0
        %727 = vmatpush2.msra.mxu0 0.0
        %728 = vmatprep.subr.mxu0 0.0
        %729 = vmatpush2.msra.mxu0 0.0
        %730 = vmatprep.subr.mxu0 0.0
        %731 = vmatpush2.msra.mxu0 0.0
        %732 = vmatprep.subr.mxu0 0.0
        %733 = vmatpush2.msra.mxu0 0.0
        %734 = vmatprep.subr.mxu0 0.0
        %735 = vmatpush2.msra.mxu0 0.0
        %736 = vmatprep.subr.mxu0 0.0
        %737 = vmatpush2.msra.mxu0 0.0
        %738 = vmatprep.subr.mxu0 0.0
        %739 = vmatpush2.msra.mxu0 0.0
        %740 = vmatprep.subr.mxu0 0.0
        %741 = vmatpush2.msra.mxu0 0.0
        %742 = vmatprep.subr.mxu0 0.0
        %743 = vmatpush2.msra.mxu0 0.0
        %744 = vmatprep.subr.mxu0 0.0
        %745 = vmatpush2.msra.mxu0 0.0
        %746 = vmatprep.subr.mxu0 0.0
        %747 = vmatpush2.msra.mxu0 0.0
        %748 = vmatprep.subr.mxu0 0.0
        %749 = vmatpush2.msra.mxu0 0.0
        %750 = vmatprep.subr.mxu0 0.0
        %751 = vmatpush2.msra.mxu0 0.0
        %752 = vmatprep.subr.mxu0 0.0
        %753 = vmatpush2.msra.mxu0 0.0
        %754 = vmatprep.subr.mxu0 0.0
        %755 = vmatpush2.msra.mxu0 0.0
        %756 = vmatprep.subr.mxu0 0.0
        %757 = vmatpush2.msra.mxu0 0.0
        %758 = vmatprep.mubr.f32.mxu0 0.0
        %759 = vmatmul.mubr.f32.gmra.mxu0 %v683
        %v760 = vpop.f32.mrf.mxu0
        %v761 = vadd.f32 %v665, %v760
        %v762 = vpop.f32.mrf.mxu0
        %763 = vmatprep.mubr.f32.mxu0 0.0
        %764 = vmatmul.mubr.f32.gmra.mxu0 %v686
        %v765 = vpop.f32.mrf.mxu0
        %v766 = vadd.f32 %v670, %v765
        %v767 = vpop.f32.mrf.mxu0
        %768 = vmatprep.mubr.f32.mxu0 0.0
        %769 = vmatmul.mubr.f32.gmra.mxu0 %v689
        %v770 = vpop.f32.mrf.mxu0
        %v771 = vadd.f32 %v675, %v770
        %v772 = vpop.f32.mrf.mxu0
        %773 = vmatprep.mubr.f32.mxu0 0.0
        %774 = vmatmul.mubr.f32.gmra.mxu0 %v692
        %v775 = vpop.f32.mrf.mxu0
        %v776 = vadd.f32 %v680, %v775
        %v777 = vpop.f32.mrf.mxu0
        %778 = vdwg.mxu0
        %v779 = vmul.f32 %v761, 0.5
        %v780 = vmul.f32 %v766, 0.5
        %v781 = vmul.f32 %v771, 0.5
        %v782 = vmul.f32 %v776, 0.5
        %v783 = vmul.f32 %v761, 0.70710677
        %v784 = vmul.f32 %v766, 0.70710677
        %v785 = vmul.f32 %v771, 0.70710677
        %v786 = vmul.f32 %v776, 0.70710677
        %v787 = verf.f32.pop %v783
        %v788 = verf.f32.pop %v784
        %v789 = verf.f32.pop %v785
        %v790 = verf.f32.pop %v786
        %v791 = vadd.f32 %v787, 1.0
        %v792 = vadd.f32 %v788, 1.0
        %v793 = vadd.f32 %v789, 1.0
        %v794 = vadd.f32 %v790, 1.0
        %v795 = vmul.f32 %v779, %v791
        %v796 = vmul.f32 %v780, %v792
        %v797 = vmul.f32 %v781, %v793
        %v798 = vmul.f32 %v782, %v794
        %v799 = vld [vmem:[%s7] sm:$0xff]
        %v800 = vld [vmem:[%s8] sm:$0xff]
        %802 = vset.pattern.permute.xlu0 0
        %803 = vperm.xlu0 %802, %v800
        %v804 = vpop.permute.xlu0 %803
        %v807 = vsel %vm397, %v799, 0
        %809 = vmatprep.subr.mxu0 0.0
        %810 = vmatpush1.msra.mxu0 0.0
        %811 = vmatprep.subr.mxu0 0.0
        %812 = vmatpush1.msra.mxu0 0.0
        %813 = vmatprep.subr.mxu0 0.0
        %814 = vmatpush1.msra.mxu0 0.0
        %815 = vmatprep.subr.mxu0 0.0
        %816 = vmatpush1.msra.mxu0 0.0
        %817 = vmatprep.subr.mxu0 0.0
        %818 = vmatpush1.msra.mxu0 0.0
        %819 = vmatprep.subr.mxu0 0.0
        %820 = vmatpush1.msra.mxu0 0.0
        %821 = vmatprep.subr.mxu0 0.0
        %822 = vmatpush1.msra.mxu0 0.0
        %823 = vmatprep.subr.mxu0 0.0
        %824 = vmatpush1.msra.mxu0 0.0
        %825 = vmatprep.subr.mxu0 0.0
        %826 = vmatpush1.msra.mxu0 0.0
        %827 = vmatprep.subr.mxu0 0.0
        %828 = vmatpush1.msra.mxu0 0.0
        %829 = vmatprep.subr.mxu0 0.0
        %830 = vmatpush1.msra.mxu0 0.0
        %831 = vmatprep.subr.mxu0 0.0
        %832 = vmatpush1.msra.mxu0 0.0
        %833 = vmatprep.subr.mxu0 0.0
        %834 = vmatpush1.msra.mxu0 %v798
        %835 = vmatprep.subr.mxu0 0.0
        %836 = vmatpush1.msra.mxu0 %v797
        %837 = vmatprep.subr.mxu0 0.0
        %838 = vmatpush1.msra.mxu0 %v796
        %839 = vmatprep.subr.mxu0 0.0
        %840 = vmatpush1.msra.mxu0 %v795
        %841 = vmatprep.subr.mxu0 0.0
        %842 = vmatpush2.msra.mxu0 0.0
        %843 = vmatprep.subr.mxu0 0.0
        %844 = vmatpush2.msra.mxu0 0.0
        %845 = vmatprep.subr.mxu0 0.0
        %846 = vmatpush2.msra.mxu0 0.0
        %847 = vmatprep.subr.mxu0 0.0
        %848 = vmatpush2.msra.mxu0 0.0
        %849 = vmatprep.subr.mxu0 0.0
        %850 = vmatpush2.msra.mxu0 0.0
        %851 = vmatprep.subr.mxu0 0.0
        %852 = vmatpush2.msra.mxu0 0.0
        %853 = vmatprep.subr.mxu0 0.0
        %854 = vmatpush2.msra.mxu0 0.0
        %855 = vmatprep.subr.mxu0 0.0
        %856 = vmatpush2.msra.mxu0 0.0
        %857 = vmatprep.subr.mxu0 0.0
        %858 = vmatpush2.msra.mxu0 0.0
        %859 = vmatprep.subr.mxu0 0.0
        %860 = vmatpush2.msra.mxu0 0.0
        %861 = vmatprep.subr.mxu0 0.0
        %862 = vmatpush2.msra.mxu0 0.0
        %863 = vmatprep.subr.mxu0 0.0
        %864 = vmatpush2.msra.mxu0 0.0
        %865 = vmatprep.subr.mxu0 0.0
        %866 = vmatpush2.msra.mxu0 0.0
        %867 = vmatprep.subr.mxu0 0.0
        %868 = vmatpush2.msra.mxu0 0.0
        %869 = vmatprep.subr.mxu0 0.0
        %870 = vmatpush2.msra.mxu0 0.0
        %871 = vmatprep.subr.mxu0 0.0
        %872 = vmatpush2.msra.mxu0 0.0
        %873 = vmatprep.mubr.f32.mxu0 0.0
        %874 = vmatmul.mubr.f32.gmra.mxu0 %v807
        %v875 = vpop.f32.mrf.mxu0
        %v876 = vadd.f32 %v804, %v875
        %v877 = vpop.f32.mrf.mxu0
        %878 = vdwg.mxu0
        %879 = vst [vmem:[%s338] sm:$0xff] %v876
        %s880 = sand.u32 %s225, 1
        %s881 = scalar_lea.sflag [#allocation3], %s880
        %s882 = sand.u32 %s225, 1
        %s883 = smul.addr %s882, 8
        %s884 = scalar_lea.vmem [#allocation2], %s883
        // Predicated region
        $region57: #{tpu_custom_call.1} parent=55 // pred_check
          %p885 = pneg %p235
        $region58: #{tpu_custom_call.1} parent=55 // pred_check_branch
          %887 = sbr.rel (%p885) target = $region60
        $region59: #{tpu_custom_call.1} parent=55 // pred_region
          %s889 = ssub.s32 128, 128
          %890 = vsyncadd %s881, %s889
          %s891 = smul.addr %s23, 128
          %s892 = scalar_lea.hbm %s9, %s891
          %s894 = sshll.u32 %s884, 4
          %s895 = int_to_ptr.vmem [resolvable:$true] %s894
          %897 = dma.vmem_to_hbm [thread:$0]  %s895, 128, %s892, %s881
        $region60: #{tpu_custom_call.1} parent=55 // pred_fallthru
          _
      $region56: #{tpu_custom_call.1} parent=5 // pred_fallthru
        _
      %p898 = scmp.le.s32.totalorder 2, %s18
      // Predicated region
      $region61: #{tpu_custom_call.1} parent=5 // pred_check
        %p899 = pneg %p898
      $region62: #{tpu_custom_call.1} parent=5 // pred_check_branch
        %901 = sbr.rel (%p899) target = $region64
      $region63: #{tpu_custom_call.1} parent=5 // pred_region
        %s902 = ssub.s32 %s18, 2
        // Predicated region
        $region65: #{tpu_custom_call.1} parent=63 // pred_check
          %p903 = pneg %p241
        $region66: #{tpu_custom_call.1} parent=63 // pred_check_branch
          %905 = sbr.rel (%p903) target = $region68
        $region67: #{tpu_custom_call.1} parent=63 // pred_region
          %s906 = sand.u32 %s226, 1
          %s907 = scalar_lea.sflag [#allocation3], %s906
          %s908 = sand.u32 %s226, 1
          %s909 = smul.addr %s908, 8
          %s910 = scalar_lea.vmem [#allocation2], %s909
          %911 = dma.done %s907, 128
        $region68: #{tpu_custom_call.1} parent=63 // pred_fallthru
          _
      $region64: #{tpu_custom_call.1} parent=5 // pred_fallthru
        _
    $region6: #{tpu_custom_call.1} parent=1 // loop_footer
      %s22 = sadd.s32 1, %s18
    $region7: #{tpu_custom_call.1} parent=1 // loop_footer_branch
      %17 = sbr.rel target = $region3
    $region8: #{tpu_custom_call.1} parent=1 // loop_exit
      _
    %912 = vsyncpa [#allocation3], 1
    %s913 = scalar_lea.sflag [#allocation3], 1
    %914 = vsyncpa %s913, 1

</llo_original>
